<compile_context>
chip_gen: v5e
topology: v5e:2x2
jax: 0.10.0
libtpu: 0.0.40
codegen_flags: <defaults>
</compile_context>

<pallas_src>
import jax
import jax.numpy as jnp
from jax.experimental import pallas as pl
from jax.experimental.pallas import tpu as pltpu

BN_EPS = 1e-5
_VMEM_LIMIT_BYTES = 48 * 1024 * 1024


def _round_up(v, m):
    return (v + m - 1) // m * m


def _bn_kernel(x_ref, gamma_ref, beta_ref, feat_ref, feat_bf16_ref):
    # x_ref: (N, tD) f32 ; gamma/beta: (1, tD) ; outputs: (N, tD)
    x = x_ref[...].astype(jnp.float32)
    n_inv = 1.0 / x.shape[0]
    mean = jnp.sum(x, axis=0, keepdims=True) * n_inv                 # (1, tD)
    centered = x - mean                                              # reused below
    var = jnp.sum(centered * centered, axis=0, keepdims=True) * n_inv
    scale = gamma_ref[...] * jax.lax.rsqrt(var + BN_EPS)             # gamma * inv_std
    feat = centered * scale + beta_ref[...]                          # mul + add
    feat_ref[...] = feat.astype(feat_ref.dtype)
    feat_bf16_ref[...] = feat.astype(jnp.bfloat16)


def _classifier_matmul_kernel(a_ref, b_ref, o_ref, acc_ref):
    # a_ref: (tN, tD) bf16 ; b_ref: (tD, tC) bf16 ; o_ref: (tN, tC) f32
    @pl.when(pl.program_id(2) == 0)
    def _():
        acc_ref[...] = jnp.zeros_like(acc_ref)

    acc_ref[...] += jnp.dot(a_ref[...], b_ref[...],
                            preferred_element_type=jnp.float32)

    @pl.when(pl.program_id(2) == pl.num_programs(2) - 1)
    def _():
        o_ref[...] = acc_ref[...].astype(o_ref.dtype)


def bn_classifier(x, gamma, beta, w, *, block_n=128, block_c=256, block_d=512):
    """BNClassifier forward.

    x:     (N, D) float32 input features
    gamma: (D,) BatchNorm1d weight
    beta:  (D,) BatchNorm1d bias
    w:     (C, D) Linear weight (PyTorch layout, no bias)
    returns (feature (N, D) f32, cls_score (N, C) f32)
    """
    N, D = x.shape
    C = w.shape[0]

    # Lane-dense tiling: pad D and C to multiples of 128-aligned tile sizes.
    tD = min(block_d, _round_up(D, 128))
    tC = min(block_c, _round_up(C, 128))
    tN = block_n if (N % block_n == 0) else N
    D_pad = _round_up(D, tD)
    C_pad = _round_up(C, tC)

    x_p = jnp.pad(x.astype(jnp.float32), ((0, 0), (0, D_pad - D)))
    gamma_p = jnp.pad(gamma.reshape(1, -1).astype(jnp.float32),
                      ((0, 0), (0, D_pad - D)), constant_values=1.0)
    beta_p = jnp.pad(beta.reshape(1, -1).astype(jnp.float32),
                     ((0, 0), (0, D_pad - D)))
    w_t = jnp.pad(w.T.astype(jnp.float32),
                  ((0, D_pad - D), (0, C_pad - C))).astype(jnp.bfloat16)

    # ---- Kernel 1: BatchNorm1d over D tiles (full batch resident per tile) ----
    feat_p, feat_bf16 = pl.pallas_call(
        _bn_kernel,
        out_shape=(
            jax.ShapeDtypeStruct((N, D_pad), jnp.float32),
            jax.ShapeDtypeStruct((N, D_pad), jnp.bfloat16),
        ),
        grid_spec=pltpu.PrefetchScalarGridSpec(
            num_scalar_prefetch=0,
            grid=(D_pad // tD,),
            in_specs=[
                pl.BlockSpec((N, tD), lambda k: (0, k)),
                pl.BlockSpec((1, tD), lambda k: (0, k)),
                pl.BlockSpec((1, tD), lambda k: (0, k)),
            ],
            out_specs=(
                pl.BlockSpec((N, tD), lambda k: (0, k)),
                pl.BlockSpec((N, tD), lambda k: (0, k)),
            ),
        ),
        compiler_params=pltpu.CompilerParams(
            dimension_semantics=("parallel",),
            vmem_limit_bytes=_VMEM_LIMIT_BYTES,
        ),
    )(x_p, gamma_p, beta_p)

    # ---- Kernel 2: classifier matmul (N, D) @ (D, C) on the MXU (bf16, f32 acc) ----
    score_p = pl.pallas_call(
        _classifier_matmul_kernel,
        out_shape=jax.ShapeDtypeStruct((N, C_pad), jnp.float32),
        grid_spec=pltpu.PrefetchScalarGridSpec(
            num_scalar_prefetch=0,
            grid=(N // tN, C_pad // tC, D_pad // tD),
            in_specs=[
                pl.BlockSpec((tN, tD), lambda i, j, k: (i, k)),
                pl.BlockSpec((tD, tC), lambda i, j, k: (k, j)),
            ],
            out_specs=pl.BlockSpec((tN, tC), lambda i, j, k: (i, j)),
            scratch_shapes=[pltpu.VMEM((tN, tC), jnp.float32)],
        ),
        compiler_params=pltpu.CompilerParams(
            dimension_semantics=("parallel", "parallel", "arbitrary"),
            vmem_limit_bytes=_VMEM_LIMIT_BYTES,
        ),
    )(feat_bf16, w_t)

    return feat_p[:, :D], score_p[:, :C]


if __name__ == "__main__":
    # Small shapes consistent with the module: batch=8, in_dim=32, class_num=16.
    # (Real re-id shapes are much larger; tune tiles at production sizes only.)
    N, D, C = 8, 32, 16
    key = jax.random.PRNGKey(0)
    kx, kw = jax.random.split(key)

    x = jax.random.normal(kx, (N, D), dtype=jnp.float32)

    # Deterministic parameter init matching _init_params():
    gamma = jnp.ones((D,), dtype=jnp.float32)                      # BN weight = 1
    beta = jnp.zeros((D,), dtype=jnp.float32)                      # BN bias = 0 (frozen)
    w = 0.001 * jax.random.normal(kw, (C, D), dtype=jnp.float32)   # Linear ~ N(0, 0.001)

    feature, cls_score = bn_classifier(x, gamma, beta, w)
    jax.block_until_ready((feature, cls_score))

    # Reference check in plain JAX (training-mode BN, biased variance).
    mean = jnp.mean(x, axis=0, keepdims=True)
    var = jnp.mean((x - mean) ** 2, axis=0, keepdims=True)
    feat_ref = (x - mean) / jnp.sqrt(var + BN_EPS) * gamma.reshape(1, -1) + beta.reshape(1, -1)
    # Kernel matmul uses bf16 operands with f32 accumulation; mirror that here.
    score_ref = (feat_ref.astype(jnp.bfloat16).astype(jnp.float32)
                 @ w.T.astype(jnp.bfloat16).astype(jnp.float32))

    assert feature.shape == (N, D) and cls_score.shape == (N, C)
    assert jnp.allclose(feature, feat_ref, atol=1e-4), "feature mismatch"
    assert jnp.allclose(cls_score, score_ref, atol=1e-4), "cls_score mismatch"

    print("KERNEL_OK")
</pallas_src>

<mosaic_0001>
module attributes {stable_mosaic.version = 11 : i64} {
  func.func @_bn_kernel(%arg0: i32, %arg1: memref<8x128xf32, #tpu.memory_space<vmem>>, %arg2: memref<1x128xf32, #tpu.memory_space<vmem>>, %arg3: memref<1x128xf32, #tpu.memory_space<vmem>>, %arg4: memref<8x128xf32, #tpu.memory_space<vmem>>, %arg5: memref<8x128xbf16, #tpu.memory_space<vmem>>) attributes {dimension_semantics = [#tpu.dimension_semantics<parallel>], iteration_bounds = array<i64: 1>, scalar_prefetch = 0 : i64, scratch_operands = 0 : i64, tpu.core_type = #tpu.core_type<tc>, window_params = [{transform_indices = @transform_0, window_bounds = array<i64: 8, 128>}, {transform_indices = @transform_1, window_bounds = array<i64: 1, 128>}, {transform_indices = @transform_2, window_bounds = array<i64: 1, 128>}, {transform_indices = @transform_3, window_bounds = array<i64: 8, 128>}, {transform_indices = @transform_4, window_bounds = array<i64: 8, 128>}]} {
    %c0 = arith.constant 0 : index
    %c0_0 = arith.constant 0 : index
    %0 = vector.load %arg1[%c0, %c0_0] : memref<8x128xf32, #tpu.memory_space<vmem>>, vector<8x128xf32>
    %cst = arith.constant dense<0.000000e+00> : vector<128xf32>
    %1 = vector.multi_reduction <add>, %0, %cst [0] : vector<8x128xf32> to vector<128xf32>
    %2 = vector.shape_cast %1 : vector<128xf32> to vector<1x128xf32>
    %cst_1 = arith.constant 1.250000e-01 : f32
    %3 = vector.broadcast %cst_1 : f32 to vector<1x128xf32>
    %4 = arith.mulf %2, %3 : vector<1x128xf32>
    %5 = vector.broadcast %4 : vector<1x128xf32> to vector<8x128xf32>
    %6 = arith.subf %0, %5 : vector<8x128xf32>
    %7 = arith.mulf %6, %6 : vector<8x128xf32>
    %cst_2 = arith.constant dense<0.000000e+00> : vector<128xf32>
    %8 = vector.multi_reduction <add>, %7, %cst_2 [0] : vector<8x128xf32> to vector<128xf32>
    %9 = vector.shape_cast %8 : vector<128xf32> to vector<1x128xf32>
    %cst_3 = arith.constant 1.250000e-01 : f32
    %10 = vector.broadcast %cst_3 : f32 to vector<1x128xf32>
    %11 = arith.mulf %9, %10 : vector<1x128xf32>
    %c0_4 = arith.constant 0 : index
    %c0_5 = arith.constant 0 : index
    %12 = vector.load %arg2[%c0_4, %c0_5] : memref<1x128xf32, #tpu.memory_space<vmem>>, vector<1x128xf32>
    %cst_6 = arith.constant 9.99999974E-6 : f32
    %13 = vector.broadcast %cst_6 : f32 to vector<1x128xf32>
    %14 = arith.addf %11, %13 : vector<1x128xf32>
    %15 = math.rsqrt %14 : vector<1x128xf32>
    %16 = arith.mulf %12, %15 : vector<1x128xf32>
    %17 = vector.broadcast %16 : vector<1x128xf32> to vector<8x128xf32>
    %18 = arith.mulf %6, %17 : vector<8x128xf32>
    %c0_7 = arith.constant 0 : index
    %c0_8 = arith.constant 0 : index
    %19 = vector.load %arg3[%c0_7, %c0_8] : memref<1x128xf32, #tpu.memory_space<vmem>>, vector<1x128xf32>
    %20 = vector.broadcast %19 : vector<1x128xf32> to vector<8x128xf32>
    %21 = arith.addf %18, %20 : vector<8x128xf32>
    %c0_9 = arith.constant 0 : index
    %c0_10 = arith.constant 0 : index
    %22 = vector.load %arg4[%c0_9, %c0_10] : memref<8x128xf32, #tpu.memory_space<vmem>>, vector<8x128xf32>
    tpu.vector_store %arg4[%c0_9, %c0_10], %21 {strides = array<i32>} : memref<8x128xf32, #tpu.memory_space<vmem>>, vector<8x128xf32>,
    %23 = arith.truncf %21 : vector<8x128xf32> to vector<8x128xbf16>
    %c0_11 = arith.constant 0 : index
    %c0_12 = arith.constant 0 : index
    %24 = vector.load %arg5[%c0_11, %c0_12] : memref<8x128xbf16, #tpu.memory_space<vmem>>, vector<8x128xbf16>
    tpu.vector_store %arg5[%c0_11, %c0_12], %23 {strides = array<i32>} : memref<8x128xbf16, #tpu.memory_space<vmem>>, vector<8x128xbf16>,
    return
  }
  func.func @transform_0(%arg0: i32) -> (i32, i32) {
    %c0_i32 = arith.constant 0 : i32
    %c0_i32_0 = arith.constant 0 : i32
    return %c0_i32, %arg0 : i32, i32
  }
  func.func @transform_1(%arg0: i32) -> (i32, i32) {
    %c0_i32 = arith.constant 0 : i32
    %c0_i32_0 = arith.constant 0 : i32
    return %c0_i32, %arg0 : i32, i32
  }
  func.func @transform_2(%arg0: i32) -> (i32, i32) {
    %c0_i32 = arith.constant 0 : i32
    %c0_i32_0 = arith.constant 0 : i32
    return %c0_i32, %arg0 : i32, i32
  }
  func.func @transform_3(%arg0: i32) -> (i32, i32) {
    %c0_i32 = arith.constant 0 : i32
    %c0_i32_0 = arith.constant 0 : i32
    return %c0_i32, %arg0 : i32, i32
  }
  func.func @transform_4(%arg0: i32) -> (i32, i32) {
    %c0_i32 = arith.constant 0 : i32
    %c0_i32_0 = arith.constant 0 : i32
    return %c0_i32, %arg0 : i32, i32
  }
}

</mosaic_0001>

<llo_original>
// kernel: tpu_custom_call.1
$region0: #{tpu_custom_call.1}
  #allocation0 [shape = 'u32[]', space=smem, size = 0x4, offset = 0x4, fixed_abs, tag = 'smem constant byte address 0x4 - core index']
  #allocation1 [shape = 'u32[72,128]{1,0:T(1,128)}', space=vmem, size = 0x9000, scoped, tag = 'internal scratch']
  %s0 = inlined_call_operand.hbm [shape: f32[8,128], index: 0, kind: input, shape index: {}]
  %s1 = inlined_call_operand.hbm [shape: f32[1,128], index: 1, kind: input, shape index: {}]
  %s2 = inlined_call_operand.vmem [shape: f32[1,128], index: 2, kind: input, shape index: {}]
  %s3 = inlined_call_operand.hbm [shape: f32[8,128], index: 3, kind: output, shape index: {0}]
  %s4 = inlined_call_operand.hbm [shape: bf16[8,128], index: 4, kind: output, shape index: {1}]
  %5 = xla_tuple %s3, %s4
  %s6 = sld [smem:[#allocation0]]
  $region38: #{tpu_custom_call.1} parent=0
    _
  %s8 = ssub.s32 1, %s6
  %s9 = scalar_select 0, %s8, %s6
  $region1: #{tpu_custom_call.1} parent=0
    #allocation2 [shape = 'u8[4096]{0}', space=vmem, size = 0x1000, scoped, tag = 'input window, operand 0, single buffered']
    #allocation3 [shape = 's32[1]{0}', space=sflag, size = 0x4, scoped, tag = 'scoped memory for tpu_custom_call.1']
    #allocation4 [shape = 's32[1]{0}', space=sflag, size = 0x4, scoped, tag = 'scoped memory for tpu_custom_call.1']
    #allocation5 [shape = 'u8[512]{0}', space=vmem, size = 0x400, scoped, tag = 'input window, operand 1, single buffered']
    #allocation6 [shape = 's32[1]{0}', space=sflag, size = 0x4, scoped, tag = 'scoped memory for tpu_custom_call.1']
    #allocation7 [shape = 'u8[4096]{0}', space=vmem, size = 0x1000, scoped, tag = 'output window, operand 0, single buffered']
    #allocation8 [shape = 'u8[2048]{0}', space=vmem, size = 0x800, scoped, tag = 'output window, operand 1, single buffered']
    #allocation9 [shape = 's32[1]{0}', space=sflag, size = 0x4, scoped, tag = 'scoped memory for tpu_custom_call.1']
    %10 = vsyncpa [#allocation3], 0
    %11 = vsyncpa [#allocation6], 0
    %12 = vsyncpa [#allocation4], 0
    %13 = vsyncpa [#allocation9], 0
    // Predicated region
    $region2: #{tpu_custom_call.1} parent=1 // pred_check
      _
    $region3: #{tpu_custom_call.1} parent=1 // pred_check_branch
      %15 = sbr.rel (0) target = $region5
    $region4: #{tpu_custom_call.1} parent=1 // pred_region
      %17 = vsyncadd [#allocation3], 0
      %s19 = sshll.u32 %s0, 4
      %s20 = int_to_ptr.hbm [resolvable:$true] %s19
      %s21 = sshll.u32 [#allocation2], 4
      %s22 = int_to_ptr.vmem [resolvable:$true] %s21
      %24 = dma.hbm_to_vmem [thread:$0]  %s20, 128, %s22, [#allocation3]
    $region5: #{tpu_custom_call.1} parent=1 // pred_fallthru
      _
    // Predicated region
    $region6: #{tpu_custom_call.1} parent=1 // pred_check
      _
    $region7: #{tpu_custom_call.1} parent=1 // pred_check_branch
      %26 = sbr.rel (0) target = $region9
    $region8: #{tpu_custom_call.1} parent=1 // pred_region
      %28 = vsyncadd [#allocation6], 0
      %s30 = sshll.u32 %s1, 4
      %s31 = int_to_ptr.hbm [resolvable:$true] %s30
      %s32 = sshll.u32 [#allocation5], 4
      %s33 = int_to_ptr.vmem [resolvable:$true] %s32
      %35 = dma.hbm_to_vmem [thread:$0]  %s31, 16, %s33, [#allocation6]
    $region9: #{tpu_custom_call.1} parent=1 // pred_fallthru
      _
    // Predicated region
    $region10: #{tpu_custom_call.1} parent=1 // pred_check
      _
    $region11: #{tpu_custom_call.1} parent=1 // pred_check_branch
      %37 = sbr.rel (0) target = $region13
    $region12: #{tpu_custom_call.1} parent=1 // pred_region
      _
    $region13: #{tpu_custom_call.1} parent=1 // pred_fallthru
      _
    // Predicated region
    $region14: #{tpu_custom_call.1} parent=1 // pred_check
      _
    $region15: #{tpu_custom_call.1} parent=1 // pred_check_branch
      %39 = sbr.rel (0) target = $region17
    $region16: #{tpu_custom_call.1} parent=1 // pred_region
      %41 = dma.done [#allocation3], 128
    $region17: #{tpu_custom_call.1} parent=1 // pred_fallthru
      _
    // Predicated region
    $region18: #{tpu_custom_call.1} parent=1 // pred_check
      _
    $region19: #{tpu_custom_call.1} parent=1 // pred_check_branch
      %43 = sbr.rel (0) target = $region21
    $region20: #{tpu_custom_call.1} parent=1 // pred_region
      %45 = dma.done [#allocation6], 16
    $region21: #{tpu_custom_call.1} parent=1 // pred_fallthru
      _
    %v46 = vld [vmem:[#allocation2] sm:$0xff]
    %v47 = vrot.slane %v46, 4
    %v48 = vadd.f32 %v46, %v47
    %v49 = vrot.slane %v48, 2
    %v50 = vadd.f32 %v48, %v49
    %v51 = vrot.slane %v50, 1
    %v52 = vadd.f32 %v50, %v51
    %v53 = vmul.f32 %v52, 0.125
    %v54 = vsub.f32 %v46, %v53
    %v55 = vmul.f32 %v54, %v54
    %v56 = vrot.slane %v55, 4
    %v57 = vadd.f32 %v55, %v56
    %v58 = vrot.slane %v57, 2
    %v59 = vadd.f32 %v57, %v58
    %v60 = vrot.slane %v59, 1
    %v61 = vadd.f32 %v59, %v60
    %v62 = vmul.f32 %v61, 0.125
    %v63 = vld [vmem:[#allocation5] sm:$0x1]
    %v64 = vadd.f32 %v62, 1e-05
    %v65 = vrsqrt.pop %v64
    %v66 = vmul.f32 %v65, %v64
    %v67 = vmul.f32 %v66, %v65
    %v68 = vmul.f32 0.5, %v67
    %v69 = vsub.f32 1.5, %v68
    %v70 = vmul.f32 %v65, %v69
    %vm71 = vweird.f32 %v64
    %vm72 = vweird.f32 %v65
    %vm73 = vmor %vm71, %vm72
    %v74 = vsel %vm73, %v65, %v70
    %v75 = vmul.f32 %v63, %v74
    %v77 = vperm.slane %v75, 0
    %v79 = vmul.f32 %v54, %v77
    %v80 = vld [vmem:[%s2] sm:$0x1]
    %v82 = vperm.slane %v80, 0
    %v84 = vadd.f32 %v79, %v82
    %85 = vst [vmem:[#allocation7] sm:$0xff] %v84
    %v86 = vpack.c.bf16 %v84, %v84
    %87 = vst [vmem:[#allocation8] sm:$0xf] %v86
    // Predicated region
    $region22: #{tpu_custom_call.1} parent=1 // pred_check
      _
    $region23: #{tpu_custom_call.1} parent=1 // pred_check_branch
      %89 = sbr.rel (0) target = $region25
    $region24: #{tpu_custom_call.1} parent=1 // pred_region
      %91 = vsyncadd [#allocation4], 0
      %s93 = sshll.u32 [#allocation7], 4
      %s94 = int_to_ptr.vmem [resolvable:$true] %s93
      %s95 = sshll.u32 %s3, 4
      %s96 = int_to_ptr.hbm [resolvable:$true] %s95
      %98 = dma.vmem_to_hbm [thread:$0]  %s94, 128, %s96, [#allocation4]
    $region25: #{tpu_custom_call.1} parent=1 // pred_fallthru
      _
    // Predicated region
    $region26: #{tpu_custom_call.1} parent=1 // pred_check
      _
    $region27: #{tpu_custom_call.1} parent=1 // pred_check_branch
      %100 = sbr.rel (0) target = $region29
    $region28: #{tpu_custom_call.1} parent=1 // pred_region
      %102 = vsyncadd [#allocation9], 0
      %s104 = sshll.u32 [#allocation8], 4
      %s105 = int_to_ptr.vmem [resolvable:$true] %s104
      %s106 = sshll.u32 %s4, 4
      %s107 = int_to_ptr.hbm [resolvable:$true] %s106
      %109 = dma.vmem_to_hbm [thread:$0]  %s105, 64, %s107, [#allocation9]
    $region29: #{tpu_custom_call.1} parent=1 // pred_fallthru
      _
    // Predicated region
    $region30: #{tpu_custom_call.1} parent=1 // pred_check
      _
    $region31: #{tpu_custom_call.1} parent=1 // pred_check_branch
      %111 = sbr.rel (0) target = $region33
    $region32: #{tpu_custom_call.1} parent=1 // pred_region
      %113 = dma.done [#allocation4], 128
    $region33: #{tpu_custom_call.1} parent=1 // pred_fallthru
      _
    // Predicated region
    $region34: #{tpu_custom_call.1} parent=1 // pred_check
      _
    $region35: #{tpu_custom_call.1} parent=1 // pred_check_branch
      %115 = sbr.rel (0) target = $region37
    $region36: #{tpu_custom_call.1} parent=1 // pred_region
      %117 = dma.done [#allocation9], 64
    $region37: #{tpu_custom_call.1} parent=1 // pred_fallthru
      _
    %118 = vsyncpa [#allocation3], 1
    %119 = vsyncpa [#allocation6], 1
    %120 = vsyncpa [#allocation4], 1
    %121 = vsyncpa [#allocation9], 1

</llo_original>
